<compile_context>
chip_gen: v6e
topology: v6e:2x2x1
jax: 0.10.0
libtpu: 0.0.40
codegen_flags: <defaults>
</compile_context>

<pallas_src>
import jax
import jax.numpy as jnp
from jax.experimental import pallas as pl
from jax.experimental.pallas import tpu as pltpu


def time2vec_kernel(tau_ref, wemb_ref, b_ref, fc_ref, fcb_ref, mask_ref, out_ref):
    # tau:  (T, F)      folded batch rows (F original rows per vreg row)
    # wemb: (F, F*H)    block-diagonal rows of [w | w0]
    # b:    (1, F*H)    tiled [b | b0]
    # fc:   (F*H, F*H)  block-diagonal copies of fc_w.T
    # fcb:  (1, F*H)    tiled fc bias
    # mask: (1, F*H)    1.0 where cos() applies (first H-1 lanes of each H-group)
    z = jnp.dot(tau_ref[...], wemb_ref[...], preferred_element_type=jnp.float32)
    z = z + b_ref[...]
    t2v = jnp.where(mask_ref[...] != 0.0, jnp.cos(z), z)
    out = jnp.dot(t2v, fc_ref[...], preferred_element_type=jnp.float32) + fcb_ref[...]
    out_ref[...] = out.astype(out_ref.dtype)


def _round_up(x, m):
    return ((x + m - 1) // m) * m


def time2vec_forward(tau, w0, b0, w, b, fc_w, fc_b, *, tile_rows=8192, out_dtype=None):
    """tau: (N, 1) float32. Returns (N, H), matching the PyTorch Time2Vec forward."""
    n = tau.shape[0]
    hidden = fc_w.shape[0]
    dtype = tau.dtype
    out_dtype = out_dtype if out_dtype is not None else dtype

    # Fold factor: pack `fold` batch rows per 128-lane vreg row when H divides 128.
    # Fallback fold=1 is correct but stores become masked sub-128-lane vst.msk.
    fold = 128 // hidden if (hidden <= 128 and 128 % hidden == 0) else 1
    lanes = fold * hidden

    # Packed CosineActivation params: columns [w | w0], biases [b | b0].
    w_all = jnp.concatenate([w.reshape(-1), w0.reshape(-1)]).astype(dtype)   # (H,)
    b_all = jnp.concatenate([b.reshape(-1), b0.reshape(-1)]).astype(dtype)   # (H,)

    eye_f = jnp.eye(fold, dtype=dtype)
    w_embed = jnp.kron(eye_f, w_all.reshape(1, hidden))                  # (fold, lanes)
    b_tiled = jnp.tile(b_all, fold).reshape(1, lanes)                    # (1, lanes)
    fc_block = jnp.kron(eye_f, fc_w.T.astype(dtype))                     # (lanes, lanes)
    fcb_tiled = jnp.tile(fc_b.astype(dtype), fold).reshape(1, lanes)     # (1, lanes)
    cos_mask = ((jnp.arange(lanes) % hidden) < hidden - 1).astype(dtype).reshape(1, lanes)

    # Fold the batch: (N, 1) row-major -> (n4, fold).  Pad only to sublane
    # granularity of the folded view (8 folded rows); Pallas masks the trailing
    # partial grid block, so no padding up to tile_rows is needed.
    n4 = pl.cdiv(n, fold)
    padded_n4 = _round_up(max(n4, 8), 8)
    padded_n = padded_n4 * fold
    if padded_n == n:
        tau_flat = tau.reshape(-1)
    else:
        tau_flat = jnp.zeros((padded_n,), dtype).at[:n].set(tau.reshape(-1))
    tau_fold = tau_flat.reshape(padded_n4, fold)

    # Tile size: multiple of 8 sublanes, no larger than the (padded) folded batch.
    tile_rows = max(8, _round_up(tile_rows, 8))
    tile_rows = min(tile_rows, padded_n4)
    grid = (pl.cdiv(padded_n4, tile_rows),)

    # VMEM budget (lane-padded): tau buffer = tile_rows*128*4 B, out buffer =
    # tile_rows*ceil(lanes/128)*128*itemsize B, both double-buffered, plus the
    # resident parameter tiles (also double-buffered by the pipeline).
    out_lanes = _round_up(lanes, 128)
    tau_buf = tile_rows * 128 * jnp.dtype(dtype).itemsize
    out_buf = tile_rows * out_lanes * jnp.dtype(out_dtype).itemsize
    param_buf = (fold * lanes + 3 * lanes + lanes * lanes) * jnp.dtype(dtype).itemsize
    vmem_limit = 2 * (tau_buf + out_buf + param_buf) + (4 << 20)   # + headroom
    vmem_limit = min(_round_up(vmem_limit, 1 << 20), 100 << 20)

    const = lambda i: (0, 0)

    out = pl.pallas_call(
        time2vec_kernel,
        out_shape=jax.ShapeDtypeStruct((padded_n4, lanes), out_dtype),
        grid=grid,
        in_specs=[
            pl.BlockSpec((tile_rows, fold), lambda i: (i, 0)),   # streamed input
            pl.BlockSpec((fold, lanes), const),                  # resident params
            pl.BlockSpec((1, lanes), const),
            pl.BlockSpec((lanes, lanes), const),
            pl.BlockSpec((1, lanes), const),
            pl.BlockSpec((1, lanes), const),
        ],
        out_specs=pl.BlockSpec((tile_rows, lanes), lambda i: (i, 0)),
        compiler_params=pltpu.CompilerParams(
            dimension_semantics=("parallel",),
            vmem_limit_bytes=vmem_limit,
        ),
    )(tau_fold, w_embed, b_tiled, fc_block, fcb_tiled, cos_mask)

    # (padded_n4, fold*H) row-major is exactly (padded_n, H) row-major.
    out = out.reshape(padded_n, hidden)
    if padded_n != n:
        out = out[:n]
    return out


def time2vec_reference(tau, w0, b0, w, b, fc_w, fc_b):
    """Pure-JAX reference mirroring the PyTorch forward exactly."""
    v1 = jnp.cos(tau @ w + b)
    v2 = tau @ w0 + b0
    t2v = jnp.concatenate([v1, v2], axis=1)
    return t2v @ fc_w.T + fc_b


if __name__ == "__main__":
    hidden_dim = 32
    batch = 8

    key = jax.random.PRNGKey(0)
    k_tau, k_w0, k_b0, k_w, k_b, k_fcw, k_fcb = jax.random.split(key, 7)

    # Shapes from Time2Vec.__init__:
    #   CosineActivation(1, H): w0 (1,1), b0 (1,), w (1,H-1), b (H-1,)
    #   nn.Linear(H, H): weight (H,H), bias (H,)
    tau = jax.random.normal(k_tau, (batch, 1), dtype=jnp.float32)
    w0 = jax.random.normal(k_w0, (1, 1), dtype=jnp.float32)
    b0 = jax.random.normal(k_b0, (1,), dtype=jnp.float32)
    w = jax.random.normal(k_w, (1, hidden_dim - 1), dtype=jnp.float32)
    b = jax.random.normal(k_b, (hidden_dim - 1,), dtype=jnp.float32)
    fc_w = jax.random.normal(k_fcw, (hidden_dim, hidden_dim), dtype=jnp.float32) * 0.1
    fc_b = jax.random.normal(k_fcb, (hidden_dim,), dtype=jnp.float32) * 0.1

    # Small batch (single partial block).
    out = jax.block_until_ready(time2vec_forward(tau, w0, b0, w, b, fc_w, fc_b))
    ref = time2vec_reference(tau, w0, b0, w, b, fc_w, fc_b)
    assert out.shape == (batch, hidden_dim)
    assert jnp.allclose(out, ref, atol=1e-4, rtol=1e-4), "mismatch vs reference (small)"

    # Larger, non-multiple batch: default tile_rows (one big block, clamped).
    big = 8200
    tau_big = jax.random.normal(k_tau, (big, 1), dtype=jnp.float32)
    ref_big = time2vec_reference(tau_big, w0, b0, w, b, fc_w, fc_b)
    out_big = jax.block_until_ready(time2vec_forward(tau_big, w0, b0, w, b, fc_w, fc_b))
    assert out_big.shape == (big, hidden_dim)
    assert jnp.allclose(out_big, ref_big, atol=1e-4, rtol=1e-4), "mismatch vs reference (big)"

    # Same batch with a small tile to exercise the multi-step grid and the
    # masked trailing partial block.
    out_tiled = jax.block_until_ready(
        time2vec_forward(tau_big, w0, b0, w, b, fc_w, fc_b, tile_rows=512))
    assert jnp.allclose(out_tiled, ref_big, atol=1e-4, rtol=1e-4), "mismatch vs reference (tiled)"

    print("KERNEL_OK")
</pallas_src>

<mosaic_0001>
module attributes {stable_mosaic.version = 11 : i64} {
  func.func @time2vec_kernel(%arg0: i32, %arg1: memref<8x4xf32, #tpu.memory_space<vmem>>, %arg2: memref<4x128xf32, #tpu.memory_space<vmem>>, %arg3: memref<1x128xf32, #tpu.memory_space<vmem>>, %arg4: memref<128x128xf32, #tpu.memory_space<vmem>>, %arg5: memref<1x128xf32, #tpu.memory_space<vmem>>, %arg6: memref<1x128xf32, #tpu.memory_space<vmem>>, %arg7: memref<8x128xf32, #tpu.memory_space<vmem>>) attributes {dimension_semantics = [#tpu.dimension_semantics<parallel>], iteration_bounds = array<i64: 1>, scalar_prefetch = 0 : i64, scratch_operands = 0 : i64, tpu.core_type = #tpu.core_type<tc>, window_params = [{transform_indices = @transform_0, window_bounds = array<i64: 8, 4>}, {pipeline_mode = #tpu.pipeline_mode<synchronous>, transform_indices = @transform_1, window_bounds = array<i64: 4, 128>}, {pipeline_mode = #tpu.pipeline_mode<synchronous>, transform_indices = @transform_2, window_bounds = array<i64: 1, 128>}, {pipeline_mode = #tpu.pipeline_mode<synchronous>, transform_indices = @transform_3, window_bounds = array<i64: 128, 128>}, {pipeline_mode = #tpu.pipeline_mode<synchronous>, transform_indices = @transform_4, window_bounds = array<i64: 1, 128>}, {pipeline_mode = #tpu.pipeline_mode<synchronous>, transform_indices = @transform_5, window_bounds = array<i64: 1, 128>}, {transform_indices = @transform_6, window_bounds = array<i64: 8, 128>}]} {
    %c0 = arith.constant 0 : index
    %c0_0 = arith.constant 0 : index
    %0 = vector.load %arg1[%c0, %c0_0] : memref<8x4xf32, #tpu.memory_space<vmem>>, vector<8x4xf32>
    %c0_1 = arith.constant 0 : index
    %c0_2 = arith.constant 0 : index
    %1 = vector.load %arg2[%c0_1, %c0_2] : memref<4x128xf32, #tpu.memory_space<vmem>>, vector<4x128xf32>
    %cst = arith.constant dense<0.000000e+00> : vector<8x128xf32>
    %2 = tpu.matmul %0, %1, %cst {dimension_numbers = #tpu.dot_dimension_numbers<[1], [0], [0], [1], [0, 0, 1, 1], [], []>} : vector<8x4xf32>, vector<4x128xf32>, vector<8x128xf32> -> vector<8x128xf32>
    %c0_3 = arith.constant 0 : index
    %c0_4 = arith.constant 0 : index
    %3 = vector.load %arg3[%c0_3, %c0_4] : memref<1x128xf32, #tpu.memory_space<vmem>>, vector<1x128xf32>
    %4 = vector.broadcast %3 : vector<1x128xf32> to vector<8x128xf32>
    %5 = arith.addf %2, %4 : vector<8x128xf32>
    %c0_5 = arith.constant 0 : index
    %c0_6 = arith.constant 0 : index
    %6 = vector.load %arg6[%c0_5, %c0_6] : memref<1x128xf32, #tpu.memory_space<vmem>>, vector<1x128xf32>
    %cst_7 = arith.constant 0.000000e+00 : f32
    %7 = vector.broadcast %cst_7 : f32 to vector<1x128xf32>
    %8 = arith.cmpf one, %6, %7 : vector<1x128xf32>
    %9 = math.cos %5 : vector<8x128xf32>
    %10 = vector.shape_cast %8 : vector<1x128xi1> to vector<1x128xi1>
    %11 = vector.broadcast %10 : vector<1x128xi1> to vector<8x128xi1>
    %12 = arith.select %11, %9, %5 : vector<8x128xi1>, vector<8x128xf32>
    %c0_8 = arith.constant 0 : index
    %c0_9 = arith.constant 0 : index
    %13 = vector.load %arg4[%c0_8, %c0_9] : memref<128x128xf32, #tpu.memory_space<vmem>>, vector<128x128xf32>
    %cst_10 = arith.constant dense<0.000000e+00> : vector<8x128xf32>
    %14 = tpu.matmul %12, %13, %cst_10 {dimension_numbers = #tpu.dot_dimension_numbers<[1], [0], [0], [1], [0, 0, 1, 1], [], []>} : vector<8x128xf32>, vector<128x128xf32>, vector<8x128xf32> -> vector<8x128xf32>
    %c0_11 = arith.constant 0 : index
    %c0_12 = arith.constant 0 : index
    %15 = vector.load %arg5[%c0_11, %c0_12] : memref<1x128xf32, #tpu.memory_space<vmem>>, vector<1x128xf32>
    %16 = vector.broadcast %15 : vector<1x128xf32> to vector<8x128xf32>
    %17 = arith.addf %14, %16 : vector<8x128xf32>
    %c0_13 = arith.constant 0 : index
    %c0_14 = arith.constant 0 : index
    %18 = vector.load %arg7[%c0_13, %c0_14] : memref<8x128xf32, #tpu.memory_space<vmem>>, vector<8x128xf32>
    tpu.vector_store %arg7[%c0_13, %c0_14], %17 {strides = array<i32>} : memref<8x128xf32, #tpu.memory_space<vmem>>, vector<8x128xf32>,
    return
  }
  func.func @transform_0(%arg0: i32) -> (i32, i32) {
    %c0_i32 = arith.constant 0 : i32
    %c0_i32_0 = arith.constant 0 : i32
    return %arg0, %c0_i32 : i32, i32
  }
  func.func @transform_1(%arg0: i32) -> (i32, i32) {
    %c0_i32 = arith.constant 0 : i32
    %c0_i32_0 = arith.constant 0 : i32
    %c0_i32_1 = arith.constant 0 : i32
    return %c0_i32, %c0_i32_0 : i32, i32
  }
  func.func @transform_2(%arg0: i32) -> (i32, i32) {
    %c0_i32 = arith.constant 0 : i32
    %c0_i32_0 = arith.constant 0 : i32
    %c0_i32_1 = arith.constant 0 : i32
    return %c0_i32, %c0_i32_0 : i32, i32
  }
  func.func @transform_3(%arg0: i32) -> (i32, i32) {
    %c0_i32 = arith.constant 0 : i32
    %c0_i32_0 = arith.constant 0 : i32
    %c0_i32_1 = arith.constant 0 : i32
    return %c0_i32, %c0_i32_0 : i32, i32
  }
  func.func @transform_4(%arg0: i32) -> (i32, i32) {
    %c0_i32 = arith.constant 0 : i32
    %c0_i32_0 = arith.constant 0 : i32
    %c0_i32_1 = arith.constant 0 : i32
    return %c0_i32, %c0_i32_0 : i32, i32
  }
  func.func @transform_5(%arg0: i32) -> (i32, i32) {
    %c0_i32 = arith.constant 0 : i32
    %c0_i32_0 = arith.constant 0 : i32
    %c0_i32_1 = arith.constant 0 : i32
    return %c0_i32, %c0_i32_0 : i32, i32
  }
  func.func @transform_6(%arg0: i32) -> (i32, i32) {
    %c0_i32 = arith.constant 0 : i32
    %c0_i32_0 = arith.constant 0 : i32
    return %arg0, %c0_i32 : i32, i32
  }
}

</mosaic_0001>

<llo_original>
// kernel: tpu_custom_call.1
$region0: #{tpu_custom_call.1}
  #allocation0 [shape = 'u32[]', space=smem, size = 0x4, offset = 0x4, fixed_abs, tag = 'smem constant byte address 0x4 - core index']
  #allocation1 [shape = 'u32[144,128]{1,0:T(1,128)}', space=vmem, size = 0x12000, scoped, tag = 'internal scratch']
  %s0 = inlined_call_operand.vmem [shape: f32[8,4], index: 0, kind: input, shape index: {}]
  %s1 = inlined_call_operand.vmem [shape: f32[4,128], index: 1, kind: input, shape index: {}]
  %s2 = inlined_call_operand.vmem [shape: f32[1,128], index: 2, kind: input, shape index: {}]
  %s3 = inlined_call_operand.hbm [shape: f32[128,128], index: 3, kind: input, shape index: {}]
  %s4 = inlined_call_operand.vmem [shape: f32[1,128], index: 4, kind: input, shape index: {}]
  %s5 = inlined_call_operand.vmem [shape: f32[1,128], index: 5, kind: input, shape index: {}]
  %s6 = inlined_call_operand.hbm [shape: f32[8,128], index: 6, kind: output, shape index: {}]
  %s7 = sld [smem:[#allocation0]]
  $region38: #{tpu_custom_call.1} parent=0
    _
  %s9 = ssub.s32 1, %s7
  %s10 = scalar_select 0, %s9, %s7
  $region1: #{tpu_custom_call.1} parent=0
    #allocation2 [shape = 'u8[65536]{0}', space=vmem, size = 0x10000, scoped, tag = 'input window, operand 3, single buffered']
    #allocation3 [shape = 's32[1]{0}', space=sflag, size = 0x4, scoped, tag = 'scoped memory for tpu_custom_call.1']
    #allocation4 [shape = 's32[1]{0}', space=sflag, size = 0x4, scoped, tag = 'scoped memory for tpu_custom_call.1']
    #allocation5 [shape = 'u8[4096]{0}', space=vmem, size = 0x1000, scoped, tag = 'output window, operand 0, single buffered']
    %11 = vsyncpa [#allocation3], 0
    %12 = vsyncpa [#allocation4], 0
    // Predicated region
    $region2: #{tpu_custom_call.1} parent=1 // pred_check
      _
    $region3: #{tpu_custom_call.1} parent=1 // pred_check_branch
      %14 = sbr.rel (0) target = $region5
    $region4: #{tpu_custom_call.1} parent=1 // pred_region
      _
    $region5: #{tpu_custom_call.1} parent=1 // pred_fallthru
      _
    // Predicated region
    $region6: #{tpu_custom_call.1} parent=1 // pred_check
      _
    $region7: #{tpu_custom_call.1} parent=1 // pred_check_branch
      %16 = sbr.rel (0) target = $region9
    $region8: #{tpu_custom_call.1} parent=1 // pred_region
      _
    $region9: #{tpu_custom_call.1} parent=1 // pred_fallthru
      _
    // Predicated region
    $region10: #{tpu_custom_call.1} parent=1 // pred_check
      _
    $region11: #{tpu_custom_call.1} parent=1 // pred_check_branch
      %18 = sbr.rel (0) target = $region13
    $region12: #{tpu_custom_call.1} parent=1 // pred_region
      _
    $region13: #{tpu_custom_call.1} parent=1 // pred_fallthru
      _
    // Predicated region
    $region14: #{tpu_custom_call.1} parent=1 // pred_check
      _
    $region15: #{tpu_custom_call.1} parent=1 // pred_check_branch
      %20 = sbr.rel (0) target = $region17
    $region16: #{tpu_custom_call.1} parent=1 // pred_region
      %s22 = ssub.s32 2048, 2048
      %23 = vsyncadd [#allocation3], %s22
      %s24 = sshll.u32 [#allocation2], 4
      %s25 = int_to_ptr.vmem [resolvable:$true] %s24
      %30 = dma.hbm_to_vmem [thread:$0]  %s3, 2048, %s25, [#allocation3], 128, 128, 8
    $region17: #{tpu_custom_call.1} parent=1 // pred_fallthru
      _
    // Predicated region
    $region18: #{tpu_custom_call.1} parent=1 // pred_check
      _
    $region19: #{tpu_custom_call.1} parent=1 // pred_check_branch
      %32 = sbr.rel (0) target = $region21
    $region20: #{tpu_custom_call.1} parent=1 // pred_region
      _
    $region21: #{tpu_custom_call.1} parent=1 // pred_fallthru
      _
    // Predicated region
    $region22: #{tpu_custom_call.1} parent=1 // pred_check
      _
    $region23: #{tpu_custom_call.1} parent=1 // pred_check_branch
      %34 = sbr.rel (0) target = $region25
    $region24: #{tpu_custom_call.1} parent=1 // pred_region
      _
    $region25: #{tpu_custom_call.1} parent=1 // pred_fallthru
      _
    // Predicated region
    $region26: #{tpu_custom_call.1} parent=1 // pred_check
      _
    $region27: #{tpu_custom_call.1} parent=1 // pred_check_branch
      %36 = sbr.rel (0) target = $region29
    $region28: #{tpu_custom_call.1} parent=1 // pred_region
      %37 = dma.done [#allocation3], 2048
    $region29: #{tpu_custom_call.1} parent=1 // pred_fallthru
      _
    %v38 = vld [vmem:[%s0] sm:$0xff]
    %v39 = vld [vmem:[%s1] sm:$0xf]
    %v40 = vld [vmem:[%s2] sm:$0x1]
    %v42 = vlaneseq
    %v43 = vshrl.u32 %v42, 7
    %v44 = vsub.s32 0, %v43
    %v45 = vrot.slane %v40, %v44
    %vm47 = vcmask 31744
    %v49 = vsel %vm47, %v38, 0
    %vm51 = vcmask 1043456
    %v53 = vsel %vm51, %v39, 0
    %55 = vmatprep.subr.mxu0 0.0
    %56 = vmatpush1.msra.mxu0 0.0
    %57 = vmatprep.subr.mxu0 0.0
    %58 = vmatpush1.msra.mxu0 0.0
    %59 = vmatprep.subr.mxu0 0.0
    %60 = vmatpush1.msra.mxu0 0.0
    %61 = vmatprep.subr.mxu0 0.0
    %62 = vmatpush1.msra.mxu0 0.0
    %63 = vmatprep.subr.mxu0 0.0
    %64 = vmatpush1.msra.mxu0 0.0
    %65 = vmatprep.subr.mxu0 0.0
    %66 = vmatpush1.msra.mxu0 0.0
    %67 = vmatprep.subr.mxu0 0.0
    %68 = vmatpush1.msra.mxu0 0.0
    %69 = vmatprep.subr.mxu0 0.0
    %70 = vmatpush1.msra.mxu0 0.0
    %71 = vmatprep.subr.mxu0 0.0
    %72 = vmatpush1.msra.mxu0 0.0
    %73 = vmatprep.subr.mxu0 0.0
    %74 = vmatpush1.msra.mxu0 0.0
    %75 = vmatprep.subr.mxu0 0.0
    %76 = vmatpush1.msra.mxu0 0.0
    %77 = vmatprep.subr.mxu0 0.0
    %78 = vmatpush1.msra.mxu0 0.0
    %79 = vmatprep.subr.mxu0 0.0
    %80 = vmatpush1.msra.mxu0 0.0
    %81 = vmatprep.subr.mxu0 0.0
    %82 = vmatpush1.msra.mxu0 0.0
    %83 = vmatprep.subr.mxu0 0.0
    %84 = vmatpush1.msra.mxu0 0.0
    %85 = vmatprep.subr.mxu0 0.0
    %86 = vmatpush1.msra.mxu0 %v53
    %87 = vmatprep.subr.mxu0 0.0
    %88 = vmatpush2.msra.mxu0 0.0
    %89 = vmatprep.subr.mxu0 0.0
    %90 = vmatpush2.msra.mxu0 0.0
    %91 = vmatprep.subr.mxu0 0.0
    %92 = vmatpush2.msra.mxu0 0.0
    %93 = vmatprep.subr.mxu0 0.0
    %94 = vmatpush2.msra.mxu0 0.0
    %95 = vmatprep.subr.mxu0 0.0
    %96 = vmatpush2.msra.mxu0 0.0
    %97 = vmatprep.subr.mxu0 0.0
    %98 = vmatpush2.msra.mxu0 0.0
    %99 = vmatprep.subr.mxu0 0.0
    %100 = vmatpush2.msra.mxu0 0.0
    %101 = vmatprep.subr.mxu0 0.0
    %102 = vmatpush2.msra.mxu0 0.0
    %103 = vmatprep.subr.mxu0 0.0
    %104 = vmatpush2.msra.mxu0 0.0
    %105 = vmatprep.subr.mxu0 0.0
    %106 = vmatpush2.msra.mxu0 0.0
    %107 = vmatprep.subr.mxu0 0.0
    %108 = vmatpush2.msra.mxu0 0.0
    %109 = vmatprep.subr.mxu0 0.0
    %110 = vmatpush2.msra.mxu0 0.0
    %111 = vmatprep.subr.mxu0 0.0
    %112 = vmatpush2.msra.mxu0 0.0
    %113 = vmatprep.subr.mxu0 0.0
    %114 = vmatpush2.msra.mxu0 0.0
    %115 = vmatprep.subr.mxu0 0.0
    %116 = vmatpush2.msra.mxu0 0.0
    %117 = vmatprep.subr.mxu0 0.0
    %118 = vmatpush2.msra.mxu0 0.0
    %119 = vmatprep.mubr.f32.mxu0 0.0
    %120 = vmatmul.mubr.f32.gmra.mxu0 %v49
    %v121 = vpop.f32.mrf.mxu0
    %v122 = vadd.f32 %v45, %v121
    %v123 = vpop.f32.mrf.mxu0
    %124 = vdwg.mxu0
    %v125 = vld [vmem:[%s5] sm:$0x1]
    %vm126 = vcmp.ne.f32.partialorder %v125, 0.0
    %v127 = vand.u32 2147483647, %v122
    %vm128 = vcmp.le.f32.partialorder %v127, 0.7853982
    %vm129 = vcmp.lt.s32.totalorder %v122, 0
    %v130 = vand.u32 %v122, 2139095040
    %v131 = vshrl.u32 %v130, 23
    %v132 = vsub.s32 %v131, 127
    %v133 = vand.u32 2147483647, %v122
    %v134 = vand.u32 %v133, 8388607
    %v135 = vor.u32 %v134, 8388608
    %v136 = vsub.s32 0, %v135
    %v137 = vadd.s32 %v132, 1
    %vm138 = vcmp.gt.s32.totalorder %v137, 0
    %v139 = vsel %vm138, %v137, 0
    %v140 = vshrl.u32 %v139, 5
    %v141 = vand.u32 %v139, 31
    %v142 = vsub.s32 32, %v141
    %v143 = vshrl.u32 683565275, %v142
    %v144 = vshll.u32 683565275, %v141
    %v145 = vshrl.u32 2475754826, %v142
    %v146 = vor.u32 %v144, %v145
    %v147 = vshll.u32 2475754826, %v141
    %v148 = vshrl.u32 2131351028, %v142
    %v149 = vor.u32 %v147, %v148
    %v150 = vshll.u32 2131351028, %v141
    %v151 = vshrl.u32 2102212464, %v142
    %v152 = vor.u32 %v150, %v151
    %v153 = vshll.u32 2102212464, %v141
    %v154 = vshrl.u32 920167782, %v142
    %v155 = vor.u32 %v153, %v154
    %v156 = vshll.u32 920167782, %v141
    %v157 = vshrl.u32 1326507024, %v142
    %v158 = vor.u32 %v156, %v157
    %vm159 = vcmp.lt.s32.totalorder %v140, 1
    %vm160 = vcmp.lt.s32.totalorder %v140, 2
    %vm161 = vcmp.lt.s32.totalorder %v140, 3
    %vm162 = vcmp.lt.s32.totalorder %v140, 4
    %v163 = vsel %vm159, %v143, %v146
    %v164 = vsel %vm162, %v152, 2102212464
    %v165 = vsel %vm161, %v149, %v164
    %v166 = vsel %vm160, %v163, %v165
    %v167 = vsel %vm159, %v146, %v149
    %v168 = vsel %vm162, %v155, 920167782
    %v169 = vsel %vm161, %v152, %v168
    %v170 = vsel %vm160, %v167, %v169
    %v171 = vsel %vm159, %v149, %v152
    %v172 = vsel %vm162, %v158, 1326507024
    %v173 = vsel %vm161, %v155, %v172
    %v174 = vsel %vm160, %v171, %v173
    %v175 = vshll.u32 %v135, 8
    %v176 = vmul.u32.u64.compose %v175, %v174
    %v177 = vextract.low.u32 %v176
    %v178 = vextract.high.u32 %v176
    %v179 = vmul.u32.u64.compose %v175, %v170
    %v180 = vextract.low.u32 %v179
    %v181 = vextract.high.u32 %v179
    %v182 = vmul.u32 %v175, %v166
    %v183 = vadd.s32 %v178, %v180
    %vm184 = vc.u32 %v178, %v180
    %v185 = vadd.s32 %v181, 1
    %v186 = vsel %vm184, %v185, %v181
    %v187 = vadd.s32 %v182, %v186
    %v188 = vadd.s32 %v187, 536870912
    %v189 = vshrl.u32 %v188, 30
    %v190 = vshll.u32 %v189, 30
    %v191 = vsub.s32 %v187, %v190
    %vm192 = vcmp.lt.s32.totalorder %v191, 0
    %v193 = vsub.s32 0, %v191
    %v194 = vsel %vm192, %v193, %v191
    %v195 = vclz %v194
    %v196 = vsub.s32 %v195, 2
    %vm197 = vcmp.gt.s32.totalorder 0, %v196
    %v198 = vsel %vm197, 0, %v196
    %v199 = vsub.s32 32, %v198
    %v200 = vshll.u32 %v191, %v198
    %v201 = vshrl.u32 %v183, %v199
    %v202 = vor.u32 %v200, %v201
    %v203 = vsub.s32 4294967266, %v198
    %v204 = vadd.s32 %v203, 127
    %v205 = vshll.u32 %v204, 23
    %v206 = vor.u32 4788187, %v205
    %v207 = vand.u32 2147483647, %v206
    %v209 = vcvt.s32.f32 %v202
    %v210 = vmul.f32 %v209, %v207
    %v211 = vxor.u32 %v210, 2147483648
    %v212 = vsel %vm129, %v211, %v210
    %v213 = vsub.s32 4, %v189
    %v214 = vsel %vm129, %v213, %v189
    %v215 = vsel %vm128, %v122, %v212
    %v216 = vsel %vm128, 0, %v214
    %v217 = vcosq.f32.pop %v215
    %v218 = vsinq.f32.pop %v215
    %vm219 = vweird.f32 %v122
    %v220 = vand.u32 %v216, 3
    %vm221 = vcmp.lt.s32.totalorder %v220, 2
    %vm222 = vcmp.eq.s32.totalorder %v220, 0
    %v223 = vxor.u32 %v218, 2147483648
    %v224 = vsel %vm222, %v217, %v223
    %vm225 = vcmp.eq.s32.totalorder %v220, 2
    %v226 = vxor.u32 %v217, 2147483648
    %v227 = vsel %vm225, %v226, %v218
    %v228 = vsel %vm221, %v224, %v227
    %v229 = vsel %vm219, nan, %v228
    %v230 = vsel %vm126, 1, 0
    %v231 = vlaneseq
    %v232 = vshrl.u32 %v231, 7
    %v233 = vsub.s32 0, %v232
    %v234 = vrot.slane %v230, %v233
    %vm235 = vcmp.eq.s32.totalorder %v234, 1
    %v236 = vsel %vm235, %v229, %v122
    %v237 = vld [vmem:[#allocation2] sm:$0xff]
    %v238 = vld [vmem:[#allocation2 + $0x8] sm:$0xff]
    %v239 = vld [vmem:[#allocation2 + $0x10] sm:$0xff]
    %v240 = vld [vmem:[#allocation2 + $0x18] sm:$0xff]
    %v241 = vld [vmem:[#allocation2 + $0x20] sm:$0xff]
    %v242 = vld [vmem:[#allocation2 + $0x28] sm:$0xff]
    %v243 = vld [vmem:[#allocation2 + $0x30] sm:$0xff]
    %v244 = vld [vmem:[#allocation2 + $0x38] sm:$0xff]
    %v245 = vld [vmem:[#allocation2 + $0x40] sm:$0xff]
    %v246 = vld [vmem:[#allocation2 + $0x48] sm:$0xff]
    %v247 = vld [vmem:[#allocation2 + $0x50] sm:$0xff]
    %v248 = vld [vmem:[#allocation2 + $0x58] sm:$0xff]
    %v249 = vld [vmem:[#allocation2 + $0x60] sm:$0xff]
    %v250 = vld [vmem:[#allocation2 + $0x68] sm:$0xff]
    %v251 = vld [vmem:[#allocation2 + $0x70] sm:$0xff]
    %v252 = vld [vmem:[#allocation2 + $0x78] sm:$0xff]
    %v253 = vld [vmem:[%s4] sm:$0x1]
    %v255 = vlaneseq
    %v256 = vshrl.u32 %v255, 7
    %v257 = vsub.s32 0, %v256
    %v258 = vrot.slane %v253, %v257
    %260 = vmatprep.subr.mxu0 0.0
    %261 = vmatpush1.msra.mxu0 %v252
    %262 = vmatprep.subr.mxu0 0.0
    %263 = vmatpush1.msra.mxu0 %v251
    %264 = vmatprep.subr.mxu0 0.0
    %265 = vmatpush1.msra.mxu0 %v250
    %266 = vmatprep.subr.mxu0 0.0
    %267 = vmatpush1.msra.mxu0 %v249
    %268 = vmatprep.subr.mxu0 0.0
    %269 = vmatpush1.msra.mxu0 %v248
    %270 = vmatprep.subr.mxu0 0.0
    %271 = vmatpush1.msra.mxu0 %v247
    %272 = vmatprep.subr.mxu0 0.0
    %273 = vmatpush1.msra.mxu0 %v246
    %274 = vmatprep.subr.mxu0 0.0
    %275 = vmatpush1.msra.mxu0 %v245
    %276 = vmatprep.subr.mxu0 0.0
    %277 = vmatpush1.msra.mxu0 %v244
    %278 = vmatprep.subr.mxu0 0.0
    %279 = vmatpush1.msra.mxu0 %v243
    %280 = vmatprep.subr.mxu0 0.0
    %281 = vmatpush1.msra.mxu0 %v242
    %282 = vmatprep.subr.mxu0 0.0
    %283 = vmatpush1.msra.mxu0 %v241
    %284 = vmatprep.subr.mxu0 0.0
    %285 = vmatpush1.msra.mxu0 %v240
    %286 = vmatprep.subr.mxu0 0.0
    %287 = vmatpush1.msra.mxu0 %v239
    %288 = vmatprep.subr.mxu0 0.0
    %289 = vmatpush1.msra.mxu0 %v238
    %290 = vmatprep.subr.mxu0 0.0
    %291 = vmatpush1.msra.mxu0 %v237
    %292 = vmatprep.subr.mxu0 0.0
    %293 = vmatpush2.msra.mxu0 0.0
    %294 = vmatprep.subr.mxu0 0.0
    %295 = vmatpush2.msra.mxu0 0.0
    %296 = vmatprep.subr.mxu0 0.0
    %297 = vmatpush2.msra.mxu0 0.0
    %298 = vmatprep.subr.mxu0 0.0
    %299 = vmatpush2.msra.mxu0 0.0
    %300 = vmatprep.subr.mxu0 0.0
    %301 = vmatpush2.msra.mxu0 0.0
    %302 = vmatprep.subr.mxu0 0.0
    %303 = vmatpush2.msra.mxu0 0.0
    %304 = vmatprep.subr.mxu0 0.0
    %305 = vmatpush2.msra.mxu0 0.0
    %306 = vmatprep.subr.mxu0 0.0
    %307 = vmatpush2.msra.mxu0 0.0
    %308 = vmatprep.subr.mxu0 0.0
    %309 = vmatpush2.msra.mxu0 0.0
    %310 = vmatprep.subr.mxu0 0.0
    %311 = vmatpush2.msra.mxu0 0.0
    %312 = vmatprep.subr.mxu0 0.0
    %313 = vmatpush2.msra.mxu0 0.0
    %314 = vmatprep.subr.mxu0 0.0
    %315 = vmatpush2.msra.mxu0 0.0
    %316 = vmatprep.subr.mxu0 0.0
    %317 = vmatpush2.msra.mxu0 0.0
    %318 = vmatprep.subr.mxu0 0.0
    %319 = vmatpush2.msra.mxu0 0.0
    %320 = vmatprep.subr.mxu0 0.0
    %321 = vmatpush2.msra.mxu0 0.0
    %322 = vmatprep.subr.mxu0 0.0
    %323 = vmatpush2.msra.mxu0 0.0
    %324 = vmatprep.mubr.f32.mxu0 0.0
    %325 = vmatmul.mubr.f32.gmra.mxu0 %v236
    %v326 = vpop.f32.mrf.mxu0
    %v327 = vadd.f32 %v258, %v326
    %v328 = vpop.f32.mrf.mxu0
    %329 = vdwg.mxu0
    %330 = vst [vmem:[#allocation5] sm:$0xff] %v327
    // Predicated region
    $region30: #{tpu_custom_call.1} parent=1 // pred_check
      _
    $region31: #{tpu_custom_call.1} parent=1 // pred_check_branch
      %332 = sbr.rel (0) target = $region33
    $region32: #{tpu_custom_call.1} parent=1 // pred_region
      %s334 = ssub.s32 128, 128
      %335 = vsyncadd [#allocation4], %s334
      %s337 = sshll.u32 [#allocation5], 4
      %s338 = int_to_ptr.vmem [resolvable:$true] %s337
      %340 = dma.vmem_to_hbm [thread:$0]  %s338, 128, %s6, [#allocation4]
    $region33: #{tpu_custom_call.1} parent=1 // pred_fallthru
      _
    // Predicated region
    $region34: #{tpu_custom_call.1} parent=1 // pred_check
      _
    $region35: #{tpu_custom_call.1} parent=1 // pred_check_branch
      %342 = sbr.rel (0) target = $region37
    $region36: #{tpu_custom_call.1} parent=1 // pred_region
      %343 = dma.done [#allocation4], 128
    $region37: #{tpu_custom_call.1} parent=1 // pred_fallthru
      _
    %344 = vsyncpa [#allocation3], 1
    %345 = vsyncpa [#allocation4], 1

</llo_original>
